<compile_context>
chip_gen: v6e
topology: v6e:2x2x1
jax: 0.10.0
libtpu: 0.0.40
codegen_flags: <defaults>
</compile_context>

<pallas_src>
import functools

import jax
import jax.numpy as jnp
from jax import lax
from jax.experimental import pallas as pl
from jax.experimental.pallas import tpu as pltpu

# lax.dot_general dims for "lhs^T @ rhs" (contract dim 0 of both operands).
_TN_DIMS = (((0,), (0,)), ((), ()))


def _netvlad_kernel(x_ref, wconv_ref, cent_ref, cbias_ref, vlad_ref, *,
                    b_tile, hw):
    """One tile of `b_tile` batch elements per grid step.

    x_ref:     (b_tile*HW, C)  channels-last activations (flattened batch tile)
    wconv_ref: (C, K)          pre-transposed, pre-scaled conv weight = (2*alpha*centroids)^T
    cent_ref:  (K, C)          raw centroids (for the residual term)
    cbias_ref: (1, K)          conv bias = -alpha * ||centroid||
    vlad_ref:  (b_tile, K, C)  intra-normalized VLAD output
    """
    eps = 1e-12            # torch F.normalize default eps
    eps2 = eps * eps       # guard applied to the *squared* sum (same semantics)

    x = x_ref[...]                                              # (B*HW, C)

    # --- F.normalize(x, p=2, dim=channel):  x * rsqrt(max(sum(x^2), eps^2)) ---
    ssx = jnp.sum(x * x, axis=-1, keepdims=True)
    xn = x * lax.rsqrt(jnp.maximum(ssx, eps2))                  # (B*HW, C)

    # --- 1x1 conv (MXU, M = B*HW rows) + bias --------------------------------
    logits = jnp.dot(xn, wconv_ref[...],
                     preferred_element_type=jnp.float32)        # (B*HW, K)
    logits = logits + cbias_ref[...]

    # --- softmax over clusters (dim=K) ---------------------------------------
    logits = logits - jnp.max(logits, axis=-1, keepdims=True)
    e = jnp.exp(logits)
    a = e / jnp.sum(e, axis=-1, keepdims=True)                  # (B*HW, K)

    cent = cent_ref[...]                                        # (K, C) hoisted

    # --- per-element VLAD aggregation:  a^T @ x - c * sum_hw(a) --------------
    for b in range(b_tile):                                     # static unroll
        lo = b * hw
        a_b = a[lo:lo + hw, :]                                  # (HW, K)
        x_b = xn[lo:lo + hw, :]                                 # (HW, C)
        agg = lax.dot_general(a_b, x_b, _TN_DIMS,
                              preferred_element_type=jnp.float32)  # (K, C)
        a_sum = jnp.sum(a_b, axis=0, keepdims=True)             # (1, K)
        v = agg - cent * a_sum.T                                # (K, C)

        # intra-normalization over C (rsqrt + multiply, EUP path)
        ssv = jnp.sum(v * v, axis=-1, keepdims=True)
        v = v * lax.rsqrt(jnp.maximum(ssv, eps2))

        vlad_ref[b] = v


def netvlad_forward(x_nchw, centroids, conv_bias, fc_w, fc_b, *,
                    alpha=100.0, b_tile=8, fc_dtype=jnp.float32):
    """x_nchw: (N, C, H, W) float32.  Returns (N, OUT).

    fc_dtype: dtype used to stream the big FC weight through the XLA GEMM.
              Pass jnp.bfloat16 at production sizes to halve HBM traffic
              (MXU is bf16-native; accumulation stays f32).
    """
    N, C, H, W = x_nchw.shape
    HW = H * W
    K = centroids.shape[0]
    OUT = fc_w.shape[1]
    assert fc_w.shape[0] == K * C
    eps = 1e-12

    # Pick the batch tile: keep >=2 grid steps (v7x has 2 TensorCores) and keep
    # the sublane dim of the x block (b_tile*HW) a multiple of 8.
    b_tile = max(1, min(int(b_tile), pl.cdiv(N, 2)))
    while (b_tile * HW) % 8 != 0:
        b_tile += 1
    n_pad = pl.cdiv(N, b_tile) * b_tile
    grid = n_pad // b_tile

    # Glue: NCHW -> (N, HW, C) channels-last, pad batch, flatten to 2D rows.
    # (If the upstream producer can emit channels-last directly, this transpose
    #  — one extra HBM read+write of the activation — disappears.)
    x = jnp.transpose(x_nchw.reshape(N, C, HW), (0, 2, 1)).astype(jnp.float32)
    if n_pad != N:
        x = jnp.concatenate(
            [x, jnp.zeros((n_pad - N, HW, C), jnp.float32)], axis=0)
    x2d = x.reshape(n_pad * HW, C)

    cent = centroids.astype(jnp.float32)
    wconv = (2.0 * float(alpha)) * cent.T                       # (C, K), pre-folded
    cbias = conv_bias.reshape(1, K).astype(jnp.float32)

    kernel = functools.partial(_netvlad_kernel, b_tile=b_tile, hw=HW)

    vlad = pl.pallas_call(
        kernel,
        out_shape=jax.ShapeDtypeStruct((n_pad, K, C), jnp.float32),
        grid_spec=pltpu.PrefetchScalarGridSpec(
            num_scalar_prefetch=0,
            grid=(grid,),
            in_specs=[
                pl.BlockSpec((b_tile * HW, C), lambda n: (n, 0)),   # x rows
                pl.BlockSpec((C, K), lambda n: (0, 0)),             # conv weight^T
                pl.BlockSpec((K, C), lambda n: (0, 0)),             # centroids
                pl.BlockSpec((1, K), lambda n: (0, 0)),             # conv bias
            ],
            out_specs=pl.BlockSpec((b_tile, K, C), lambda n: (n, 0, 0)),
        ),
        compiler_params=pltpu.CompilerParams(
            dimension_semantics=("parallel",),
        ),
    )(x2d, wconv, cent, cbias)

    # --- global L2 norm + final Linear, done in XLA --------------------------
    # The (K*C, OUT) weight (~384 MiB f32 at real shapes) cannot live in VMEM,
    # and as an (N, K*C) x (K*C, OUT) GEMM it is MXU/HBM-friendly here.
    # 1/||vlad|| is folded into the (N, OUT) result (the Linear is linear).
    vlad = vlad[:N]
    flat = vlad.reshape(N, K * C)
    gss = jnp.sum(flat * flat, axis=1, keepdims=True)
    inv_fnrm = lax.rsqrt(jnp.maximum(gss, eps * eps))
    w = fc_w.astype(fc_dtype)
    acts = flat.astype(fc_dtype)
    out = jnp.dot(acts, w, preferred_element_type=jnp.float32)
    out = out * inv_fnrm + fc_b.astype(jnp.float32)[None, :]
    return out


def _reference_forward(x_nchw, centroids, conv_bias, fc_w, fc_b, alpha):
    """Pure-JAX literal transcription of the PyTorch forward (for validation)."""
    eps = 1e-12
    N, C, H, W = x_nchw.shape
    K = centroids.shape[0]
    x = x_nchw / jnp.maximum(
        jnp.sqrt(jnp.sum(x_nchw * x_nchw, axis=1, keepdims=True)), eps)
    w_conv = 2.0 * alpha * centroids                            # (K, C)
    sa = jnp.einsum("nchw,kc->nkhw", x, w_conv) + conv_bias[None, :, None, None]
    sa = sa.reshape(N, K, -1)
    sa = jax.nn.softmax(sa, axis=1)                             # (N, K, HW)
    xf = x.reshape(N, C, -1)                                    # (N, C, HW)
    residual = xf[:, None, :, :] - centroids[None, :, :, None]  # (N, K, C, HW)
    residual = residual * sa[:, :, None, :]
    vlad = residual.sum(-1)                                     # (N, K, C)
    vlad = vlad / jnp.maximum(
        jnp.sqrt(jnp.sum(vlad * vlad, axis=2, keepdims=True)), eps)
    vlad = vlad.reshape(N, -1)
    vlad = vlad / jnp.maximum(
        jnp.sqrt(jnp.sum(vlad * vlad, axis=1, keepdims=True)), eps)
    return vlad @ fc_w + fc_b


if __name__ == "__main__":
    # Scaled-down analogue of the module (module: K=64, dim=1536, HW=49,
    # fc_in = K*dim = 98304, fc_out = 1024).
    N, DIM, H, W = 3, 32, 8, 8
    K = 8
    OUT = 64
    ALPHA = 100.0

    key = jax.random.PRNGKey(0)
    k1, k2, k3, k4 = jax.random.split(key, 4)

    # centroids ~ torch.rand(K, dim)
    centroids = jax.random.uniform(k1, (K, DIM), dtype=jnp.float32)
    # conv bias = -alpha * ||centroid||_2  (as in _init_params)
    conv_bias = -ALPHA * jnp.sqrt(jnp.sum(centroids * centroids, axis=1))
    # fc params (deterministic synthetic init; nn.Linear default is uniform)
    bound = 1.0 / jnp.sqrt(jnp.float32(K * DIM))
    fc_w = jax.random.uniform(k2, (K * DIM, OUT), minval=-bound, maxval=bound,
                              dtype=jnp.float32)
    fc_b = jax.random.uniform(k3, (OUT,), minval=-bound, maxval=bound,
                              dtype=jnp.float32)

    x = jax.random.normal(k4, (N, DIM, H, W), dtype=jnp.float32)

    ref = _reference_forward(x, centroids, conv_bias, fc_w, fc_b, ALPHA)

    # Strict check: f32 FC weight path.
    out = netvlad_forward(x, centroids, conv_bias, fc_w, fc_b, alpha=ALPHA)
    out = jax.block_until_ready(out)
    assert out.shape == (N, OUT)
    assert jnp.allclose(out, ref, rtol=1e-3, atol=1e-3), "mismatch vs reference"

    # Production-style bf16 FC-weight streaming path (looser tolerance).
    out_bf16 = netvlad_forward(x, centroids, conv_bias, fc_w, fc_b,
                               alpha=ALPHA, fc_dtype=jnp.bfloat16)
    out_bf16 = jax.block_until_ready(out_bf16)
    assert jnp.allclose(out_bf16, ref, rtol=2e-2, atol=2e-2), "bf16 FC mismatch"

    print("KERNEL_OK")
</pallas_src>

<mosaic_0001>
module attributes {stable_mosaic.version = 11 : i64} {
  func.func @_netvlad_kernel(%arg0: i32, %arg1: memref<128x32xf32, #tpu.memory_space<vmem>>, %arg2: memref<32x8xf32, #tpu.memory_space<vmem>>, %arg3: memref<8x32xf32, #tpu.memory_space<vmem>>, %arg4: memref<1x8xf32, #tpu.memory_space<vmem>>, %arg5: memref<2x8x32xf32, #tpu.memory_space<vmem>>) attributes {dimension_semantics = [#tpu.dimension_semantics<parallel>], iteration_bounds = array<i64: 2>, scalar_prefetch = 0 : i64, scratch_operands = 0 : i64, tpu.core_type = #tpu.core_type<tc>, window_params = [{transform_indices = @transform_0, window_bounds = array<i64: 128, 32>}, {pipeline_mode = #tpu.pipeline_mode<synchronous>, transform_indices = @transform_1, window_bounds = array<i64: 32, 8>}, {pipeline_mode = #tpu.pipeline_mode<synchronous>, transform_indices = @transform_2, window_bounds = array<i64: 8, 32>}, {pipeline_mode = #tpu.pipeline_mode<synchronous>, transform_indices = @transform_3, window_bounds = array<i64: 1, 8>}, {transform_indices = @transform_4, window_bounds = array<i64: 2, 8, 32>}]} {
    %c0 = arith.constant 0 : index
    %c0_0 = arith.constant 0 : index
    %0 = vector.load %arg1[%c0, %c0_0] : memref<128x32xf32, #tpu.memory_space<vmem>>, vector<128x32xf32>
    %1 = arith.mulf %0, %0 : vector<128x32xf32>
    %cst = arith.constant dense<0.000000e+00> : vector<128xf32>
    %2 = vector.multi_reduction <add>, %1, %cst [1] : vector<128x32xf32> to vector<128xf32>
    %3 = vector.shape_cast %2 : vector<128xf32> to vector<128x1xf32>
    %cst_1 = arith.constant 1.000000e-24 : f32
    %4 = vector.broadcast %cst_1 : f32 to vector<128x1xf32>
    %5 = arith.maximumf %3, %4 : vector<128x1xf32>
    %6 = math.rsqrt %5 : vector<128x1xf32>
    %7 = vector.broadcast %6 : vector<128x1xf32> to vector<128x32xf32>
    %8 = arith.mulf %0, %7 : vector<128x32xf32>
    %c0_2 = arith.constant 0 : index
    %c0_3 = arith.constant 0 : index
    %9 = vector.load %arg2[%c0_2, %c0_3] : memref<32x8xf32, #tpu.memory_space<vmem>>, vector<32x8xf32>
    %cst_4 = arith.constant dense<0.000000e+00> : vector<128x8xf32>
    %10 = tpu.matmul %8, %9, %cst_4 {dimension_numbers = #tpu.dot_dimension_numbers<[1], [0], [0], [1], [0, 0, 1, 1], [], []>} : vector<128x32xf32>, vector<32x8xf32>, vector<128x8xf32> -> vector<128x8xf32>
    %c0_5 = arith.constant 0 : index
    %c0_6 = arith.constant 0 : index
    %11 = vector.load %arg4[%c0_5, %c0_6] : memref<1x8xf32, #tpu.memory_space<vmem>>, vector<1x8xf32>
    %12 = vector.broadcast %11 : vector<1x8xf32> to vector<128x8xf32>
    %13 = arith.addf %10, %12 : vector<128x8xf32>
    %cst_7 = arith.constant dense<0xFF800000> : vector<128xf32>
    %14 = vector.multi_reduction <maximumf>, %13, %cst_7 [1] : vector<128x8xf32> to vector<128xf32>
    %15 = vector.shape_cast %14 : vector<128xf32> to vector<128x1xf32>
    %16 = vector.broadcast %15 : vector<128x1xf32> to vector<128x8xf32>
    %17 = arith.subf %13, %16 : vector<128x8xf32>
    %18 = math.exp %17 : vector<128x8xf32>
    %cst_8 = arith.constant dense<0.000000e+00> : vector<128xf32>
    %19 = vector.multi_reduction <add>, %18, %cst_8 [1] : vector<128x8xf32> to vector<128xf32>
    %20 = vector.shape_cast %19 : vector<128xf32> to vector<128x1xf32>
    %21 = vector.broadcast %20 : vector<128x1xf32> to vector<128x8xf32>
    %22 = arith.divf %18, %21 : vector<128x8xf32>
    %c0_9 = arith.constant 0 : index
    %c0_10 = arith.constant 0 : index
    %23 = vector.load %arg3[%c0_9, %c0_10] : memref<8x32xf32, #tpu.memory_space<vmem>>, vector<8x32xf32>
    %24 = vector.extract_strided_slice %22 {offsets = [0, 0], sizes = [64, 8], strides = [1, 1]} : vector<128x8xf32> to vector<64x8xf32>
    %25 = vector.extract_strided_slice %8 {offsets = [0, 0], sizes = [64, 32], strides = [1, 1]} : vector<128x32xf32> to vector<64x32xf32>
    %cst_11 = arith.constant dense<0.000000e+00> : vector<8x32xf32>
    %26 = tpu.matmul %24, %25, %cst_11 {dimension_numbers = #tpu.dot_dimension_numbers<[0], [0], [1], [1], [0, 1, 1, 1], [], []>} : vector<64x8xf32>, vector<64x32xf32>, vector<8x32xf32> -> vector<8x32xf32>
    %cst_12 = arith.constant dense<0.000000e+00> : vector<8xf32>
    %27 = vector.multi_reduction <add>, %24, %cst_12 [0] : vector<64x8xf32> to vector<8xf32>
    %28 = vector.shape_cast %27 : vector<8xf32> to vector<1x8xf32>
    %29 = tpu.transpose %28, [1, 0] : vector<1x8xf32> -> vector<8x1xf32>
    %30 = vector.broadcast %29 : vector<8x1xf32> to vector<8x32xf32>
    %31 = arith.mulf %23, %30 : vector<8x32xf32>
    %32 = arith.subf %26, %31 : vector<8x32xf32>
    %33 = arith.mulf %32, %32 : vector<8x32xf32>
    %cst_13 = arith.constant dense<0.000000e+00> : vector<8xf32>
    %34 = vector.multi_reduction <add>, %33, %cst_13 [1] : vector<8x32xf32> to vector<8xf32>
    %35 = vector.shape_cast %34 : vector<8xf32> to vector<8x1xf32>
    %cst_14 = arith.constant 1.000000e-24 : f32
    %36 = vector.broadcast %cst_14 : f32 to vector<8x1xf32>
    %37 = arith.maximumf %35, %36 : vector<8x1xf32>
    %38 = math.rsqrt %37 : vector<8x1xf32>
    %39 = vector.broadcast %38 : vector<8x1xf32> to vector<8x32xf32>
    %40 = arith.mulf %32, %39 : vector<8x32xf32>
    %c0_15 = arith.constant 0 : index
    %c0_16 = arith.constant 0 : index
    %c0_17 = arith.constant 0 : index
    %41 = vector.load %arg5[%c0_15, %c0_16, %c0_17] : memref<2x8x32xf32, #tpu.memory_space<vmem>>, vector<1x8x32xf32>
    %42 = vector.shape_cast %41 : vector<1x8x32xf32> to vector<8x32xf32>
    %43 = vector.shape_cast %40 : vector<8x32xf32> to vector<1x8x32xf32>
    tpu.vector_store %arg5[%c0_15, %c0_16, %c0_17], %43 {strides = array<i32>} : memref<2x8x32xf32, #tpu.memory_space<vmem>>, vector<1x8x32xf32>,
    %44 = vector.extract_strided_slice %22 {offsets = [64, 0], sizes = [64, 8], strides = [1, 1]} : vector<128x8xf32> to vector<64x8xf32>
    %45 = vector.extract_strided_slice %8 {offsets = [64, 0], sizes = [64, 32], strides = [1, 1]} : vector<128x32xf32> to vector<64x32xf32>
    %cst_18 = arith.constant dense<0.000000e+00> : vector<8x32xf32>
    %46 = tpu.matmul %44, %45, %cst_18 {dimension_numbers = #tpu.dot_dimension_numbers<[0], [0], [1], [1], [0, 1, 1, 1], [], []>} : vector<64x8xf32>, vector<64x32xf32>, vector<8x32xf32> -> vector<8x32xf32>
    %cst_19 = arith.constant dense<0.000000e+00> : vector<8xf32>
    %47 = vector.multi_reduction <add>, %44, %cst_19 [0] : vector<64x8xf32> to vector<8xf32>
    %48 = vector.shape_cast %47 : vector<8xf32> to vector<1x8xf32>
    %49 = tpu.transpose %48, [1, 0] : vector<1x8xf32> -> vector<8x1xf32>
    %50 = vector.broadcast %49 : vector<8x1xf32> to vector<8x32xf32>
    %51 = arith.mulf %23, %50 : vector<8x32xf32>
    %52 = arith.subf %46, %51 : vector<8x32xf32>
    %53 = arith.mulf %52, %52 : vector<8x32xf32>
    %cst_20 = arith.constant dense<0.000000e+00> : vector<8xf32>
    %54 = vector.multi_reduction <add>, %53, %cst_20 [1] : vector<8x32xf32> to vector<8xf32>
    %55 = vector.shape_cast %54 : vector<8xf32> to vector<8x1xf32>
    %cst_21 = arith.constant 1.000000e-24 : f32
    %56 = vector.broadcast %cst_21 : f32 to vector<8x1xf32>
    %57 = arith.maximumf %55, %56 : vector<8x1xf32>
    %58 = math.rsqrt %57 : vector<8x1xf32>
    %59 = vector.broadcast %58 : vector<8x1xf32> to vector<8x32xf32>
    %60 = arith.mulf %52, %59 : vector<8x32xf32>
    %c1 = arith.constant 1 : index
    %c0_22 = arith.constant 0 : index
    %c0_23 = arith.constant 0 : index
    %61 = vector.load %arg5[%c1, %c0_22, %c0_23] : memref<2x8x32xf32, #tpu.memory_space<vmem>>, vector<1x8x32xf32>
    %62 = vector.shape_cast %61 : vector<1x8x32xf32> to vector<8x32xf32>
    %63 = vector.shape_cast %60 : vector<8x32xf32> to vector<1x8x32xf32>
    tpu.vector_store %arg5[%c1, %c0_22, %c0_23], %63 {strides = array<i32>} : memref<2x8x32xf32, #tpu.memory_space<vmem>>, vector<1x8x32xf32>,
    return
  }
  func.func @transform_0(%arg0: i32) -> (i32, i32) {
    %c0_i32 = arith.constant 0 : i32
    %c0_i32_0 = arith.constant 0 : i32
    return %arg0, %c0_i32 : i32, i32
  }
  func.func @transform_1(%arg0: i32) -> (i32, i32) {
    %c0_i32 = arith.constant 0 : i32
    %c0_i32_0 = arith.constant 0 : i32
    %c0_i32_1 = arith.constant 0 : i32
    return %c0_i32, %c0_i32_0 : i32, i32
  }
  func.func @transform_2(%arg0: i32) -> (i32, i32) {
    %c0_i32 = arith.constant 0 : i32
    %c0_i32_0 = arith.constant 0 : i32
    %c0_i32_1 = arith.constant 0 : i32
    return %c0_i32, %c0_i32_0 : i32, i32
  }
  func.func @transform_3(%arg0: i32) -> (i32, i32) {
    %c0_i32 = arith.constant 0 : i32
    %c0_i32_0 = arith.constant 0 : i32
    %c0_i32_1 = arith.constant 0 : i32
    return %c0_i32, %c0_i32_0 : i32, i32
  }
  func.func @transform_4(%arg0: i32) -> (i32, i32, i32) {
    %c0_i32 = arith.constant 0 : i32
    %c0_i32_0 = arith.constant 0 : i32
    %c0_i32_1 = arith.constant 0 : i32
    return %arg0, %c0_i32, %c0_i32_0 : i32, i32, i32
  }
}

</mosaic_0001>

<llo_original>
// kernel: tpu_custom_call.1
$region0: #{tpu_custom_call.1}
  #allocation0 [shape = 'u32[]', space=smem, size = 0x4, offset = 0x4, fixed_abs, tag = 'smem constant byte address 0x4 - core index']
  #allocation1 [shape = 'u32[144,128]{1,0:T(1,128)}', space=vmem, size = 0x12000, scoped, tag = 'internal scratch']
  %s0 = inlined_call_operand.vmem [shape: f32[256,32], index: 0, kind: input, shape index: {}]
  %s1 = inlined_call_operand.vmem [shape: f32[32,8], index: 1, kind: input, shape index: {}]
  %s2 = inlined_call_operand.vmem [shape: f32[8,32], index: 2, kind: input, shape index: {}]
  %s3 = inlined_call_operand.vmem [shape: f32[1,8], index: 3, kind: input, shape index: {}]
  %s4 = inlined_call_operand.hbm [shape: f32[4,8,32], index: 4, kind: output, shape index: {}]
  %s5 = sld [smem:[#allocation0]]
  $region49: #{tpu_custom_call.1} parent=0
    _
  %s7 = ssub.s32 1, %s5
  %s8 = scalar_select 0, %s7, %s5
  $region1: #{tpu_custom_call.1} parent=0
    #allocation2 [shape = 'u8[16384]{0}', space=vmem, size = 0x4000, scoped, tag = 'output window, operand 0']
    #allocation3 [shape = 's32[2]{0}', space=sflag, size = 0x8, scoped, tag = 'scoped memory for tpu_custom_call.1']
    %9 = vsyncpa [#allocation3], 0
    %s10 = scalar_lea.sflag [#allocation3], 1
    %11 = vsyncpa %s10, 0
    loop: start=0, step=1, limit=4
    $region2: #{tpu_custom_call.1} parent=1 // loop_pre_header
      _
    $region3: #{tpu_custom_call.1} parent=1 // loop_header
      %s13 = sphi 0, %s17
      %p14 = scmp.ge.s32.totalorder %s13, 4
      %s23 = sphi 0, %s25
      %s26 = sphi 0, %s23
      %s27 = sphi 0, %s26
      %s43 = sphi 0, %s27
      %s47 = sphi 0, %s47
      %s49 = sphi 0, %s47
      %s50 = sphi 0, %s49
      %s64 = sphi 0, %s50
      %s68 = sphi 0, %s68
      %s70 = sphi 0, %s68
      %s71 = sphi 0, %s70
      %s85 = sphi 0, %s71
      %s89 = sphi 0, %s89
      %s91 = sphi 0, %s89
      %s92 = sphi 0, %s91
      %s106 = sphi 0, %s92
      %s112 = sphi 0, %s114
      %s115 = sphi 0, %s112
      %s116 = sphi 0, %s115
      %s132 = sphi 0, %s116
    $region4: #{tpu_custom_call.1} parent=1 // loop_header_branch
      %16 = sbr.rel (%p14) target = $region8
    $region5: #{tpu_custom_call.1} parent=1 // loop_body
      %s18 = ssub.s32 %s13, 1
      %s19 = ssub.s32 %s13, 2
      %s20 = sadd.s32 %s13, 1
      %s21 = ssub.s32 %s13, %s20
      %p22 = scmp.eq.s32.totalorder %s21, 0
      %s24 = sadd.s32 %s23, 1
      %s25 = scalar_select %p22, %s23, %s24
      %p28 = pneg %p22
      %p29 = scmp.eq.s32.totalorder %s13, 1
      %p30 = por %p28, %p29
      %p31 = scmp.ne.s32.totalorder %s23, %s26
      %p32 = scmp.eq.s32.totalorder %s13, 0
      %p33 = por %p31, %p32
      %p34 = scmp.ne.s32.totalorder %s23, %s26
      %p35 = scmp.eq.s32.totalorder %s18, 1
      %p36 = por %p34, %p35
      %p37 = scmp.ne.s32.totalorder %s26, %s27
      %p38 = scmp.eq.s32.totalorder %s18, 0
      %p39 = por %p37, %p38
      %p40 = scmp.ne.s32.totalorder %s26, %s27
      %p41 = scmp.eq.s32.totalorder %s19, 1
      %p42 = por %p40, %p41
      %p44 = scmp.ne.s32.totalorder %s27, %s43
      %p45 = scmp.eq.s32.totalorder %s19, 0
      %p46 = por %p44, %p45
      %s48 = sadd.s32 %s47, 1
      %p51 = scmp.eq.s32.totalorder %s13, 1
      %p52 = scmp.ne.s32.totalorder %s47, %s49
      %p53 = scmp.eq.s32.totalorder %s13, 0
      %p54 = por %p52, %p53
      %p55 = scmp.ne.s32.totalorder %s47, %s49
      %p56 = scmp.eq.s32.totalorder %s18, 1
      %p57 = por %p55, %p56
      %p58 = scmp.ne.s32.totalorder %s49, %s50
      %p59 = scmp.eq.s32.totalorder %s18, 0
      %p60 = por %p58, %p59
      %p61 = scmp.ne.s32.totalorder %s49, %s50
      %p62 = scmp.eq.s32.totalorder %s19, 1
      %p63 = por %p61, %p62
      %p65 = scmp.ne.s32.totalorder %s50, %s64
      %p66 = scmp.eq.s32.totalorder %s19, 0
      %p67 = por %p65, %p66
      %s69 = sadd.s32 %s68, 1
      %p72 = scmp.eq.s32.totalorder %s13, 1
      %p73 = scmp.ne.s32.totalorder %s68, %s70
      %p74 = scmp.eq.s32.totalorder %s13, 0
      %p75 = por %p73, %p74
      %p76 = scmp.ne.s32.totalorder %s68, %s70
      %p77 = scmp.eq.s32.totalorder %s18, 1
      %p78 = por %p76, %p77
      %p79 = scmp.ne.s32.totalorder %s70, %s71
      %p80 = scmp.eq.s32.totalorder %s18, 0
      %p81 = por %p79, %p80
      %p82 = scmp.ne.s32.totalorder %s70, %s71
      %p83 = scmp.eq.s32.totalorder %s19, 1
      %p84 = por %p82, %p83
      %p86 = scmp.ne.s32.totalorder %s71, %s85
      %p87 = scmp.eq.s32.totalorder %s19, 0
      %p88 = por %p86, %p87
      %s90 = sadd.s32 %s89, 1
      %p93 = scmp.eq.s32.totalorder %s13, 1
      %p94 = scmp.ne.s32.totalorder %s89, %s91
      %p95 = scmp.eq.s32.totalorder %s13, 0
      %p96 = por %p94, %p95
      %p97 = scmp.ne.s32.totalorder %s89, %s91
      %p98 = scmp.eq.s32.totalorder %s18, 1
      %p99 = por %p97, %p98
      %p100 = scmp.ne.s32.totalorder %s91, %s92
      %p101 = scmp.eq.s32.totalorder %s18, 0
      %p102 = por %p100, %p101
      %p103 = scmp.ne.s32.totalorder %s91, %s92
      %p104 = scmp.eq.s32.totalorder %s19, 1
      %p105 = por %p103, %p104
      %p107 = scmp.ne.s32.totalorder %s92, %s106
      %p108 = scmp.eq.s32.totalorder %s19, 0
      %p109 = por %p107, %p108
      %s110 = ssub.s32 %s13, %s20
      %p111 = scmp.eq.s32.totalorder %s110, 0
      %s113 = sadd.s32 %s112, 1
      %s114 = scalar_select %p111, %s112, %s113
      %p117 = pneg %p111
      %p118 = scmp.eq.s32.totalorder %s13, 1
      %p119 = por %p117, %p118
      %p120 = scmp.ne.s32.totalorder %s112, %s115
      %p121 = scmp.eq.s32.totalorder %s13, 0
      %p122 = por %p120, %p121
      %p123 = scmp.ne.s32.totalorder %s112, %s115
      %p124 = scmp.eq.s32.totalorder %s18, 1
      %p125 = por %p123, %p124
      %p126 = scmp.ne.s32.totalorder %s115, %s116
      %p127 = scmp.eq.s32.totalorder %s18, 0
      %p128 = por %p126, %p127
      %p129 = scmp.ne.s32.totalorder %s115, %s116
      %p130 = scmp.eq.s32.totalorder %s19, 1
      %p131 = por %p129, %p130
      %p133 = scmp.ne.s32.totalorder %s116, %s132
      %p134 = scmp.eq.s32.totalorder %s19, 0
      %p135 = por %p133, %p134
      %p136 = scmp.le.s32.totalorder 1, %s13
      %p137 = scmp.lt.s32.totalorder %s13, 3
      %p138 = pnand %p136, %p137
      %p139 = pneg %p138
      // Predicated region
      $region9: #{tpu_custom_call.1} parent=5 // pred_check
        _
      $region10: #{tpu_custom_call.1} parent=5 // pred_check_branch
        %141 = sbr.rel (%p138) target = $region12
      $region11: #{tpu_custom_call.1} parent=5 // pred_region
        %s142 = ssub.s32 %s13, 1
        // Predicated region
        $region13: #{tpu_custom_call.1} parent=11 // pred_check
          %p143 = pneg %p60
        $region14: #{tpu_custom_call.1} parent=11 // pred_check_branch
          %145 = sbr.rel (%p143) target = $region16
        $region15: #{tpu_custom_call.1} parent=11 // pred_region
          _
        $region16: #{tpu_custom_call.1} parent=11 // pred_fallthru
          _
        // Predicated region
        $region17: #{tpu_custom_call.1} parent=11 // pred_check
          %p146 = pneg %p81
        $region18: #{tpu_custom_call.1} parent=11 // pred_check_branch
          %148 = sbr.rel (%p146) target = $region20
        $region19: #{tpu_custom_call.1} parent=11 // pred_region
          _
        $region20: #{tpu_custom_call.1} parent=11 // pred_fallthru
          _
        // Predicated region
        $region21: #{tpu_custom_call.1} parent=11 // pred_check
          %p149 = pneg %p102
        $region22: #{tpu_custom_call.1} parent=11 // pred_check_branch
          %151 = sbr.rel (%p149) target = $region24
        $region23: #{tpu_custom_call.1} parent=11 // pred_region
          _
        $region24: #{tpu_custom_call.1} parent=11 // pred_fallthru
          _
      $region12: #{tpu_custom_call.1} parent=5 // pred_fallthru
        _
      %p152 = scmp.lt.s32.totalorder %s13, 2
      // Predicated region
      $region25: #{tpu_custom_call.1} parent=5 // pred_check
        %p153 = pneg %p152
      $region26: #{tpu_custom_call.1} parent=5 // pred_check_branch
        %155 = sbr.rel (%p153) target = $region28
      $region27: #{tpu_custom_call.1} parent=5 // pred_region
        // Predicated region
        $region29: #{tpu_custom_call.1} parent=27 // pred_check
          %p156 = pneg %p33
        $region30: #{tpu_custom_call.1} parent=27 // pred_check_branch
          %158 = sbr.rel (%p156) target = $region32
        $region31: #{tpu_custom_call.1} parent=27 // pred_region
          %s159 = smul.u32 16, %s13
          %p160 = scmp.lt.s32.totalorder %s159, 31
          %s161 = scalar_select %p160, %s159, 31
          %s162 = smul.addr %s161, 8
          %s163 = scalar_lea.vmem %s0, %s162
          %s164 = smul.u32 16, %s13
        $region32: #{tpu_custom_call.1} parent=27 // pred_fallthru
          _
      $region28: #{tpu_custom_call.1} parent=5 // pred_fallthru
        _
      %p165 = scmp.le.s32.totalorder 1, %s13
      %p166 = scmp.lt.s32.totalorder %s13, 3
      %p167 = pnand %p165, %p166
      %p168 = pneg %p167
      // Predicated region
      $region33: #{tpu_custom_call.1} parent=5 // pred_check
        _
      $region34: #{tpu_custom_call.1} parent=5 // pred_check_branch
        %170 = sbr.rel (%p167) target = $region36
      $region35: #{tpu_custom_call.1} parent=5 // pred_region
        %s171 = ssub.s32 %s13, 1
        %s172 = smul.u32 16, %s18
        %p173 = scmp.lt.s32.totalorder %s172, 31
        %s174 = scalar_select %p173, %s172, 31
        %s175 = smul.addr %s174, 8
        %s176 = scalar_lea.vmem %s0, %s175
        %p177 = pneg %p39
        %p178 = pneg %p36
        %p179 = pneg %p60
        %p180 = pneg %p57
        %p181 = pneg %p81
        %p182 = pneg %p78
        %p183 = pneg %p102
        %p184 = pneg %p99
        %p185 = pneg %p128
        %p186 = pneg %p125
        %s187 = sand.u32 %s115, 1
        %s188 = scalar_lea.sflag [#allocation3], %s187
        %s189 = sand.u32 %s115, 1
        %s190 = smul.addr %s189, 16
        %s191 = scalar_lea.vmem [#allocation2], %s190
        %s192 = smul.u32 16, %s18
        %p193 = scmp.lt.s32.totalorder %s192, 31
        %s194 = scalar_select %p193, %s192, 31
        %s195 = smul.addr %s194, 8
        %s196 = scalar_lea.vmem %s0, %s195
        %s197 = smul.u32 16, %s18
        %s198 = smul.u32 2, %s18
        %v199 = vld [vmem:[%s196] sm:$0xff]
        %v200 = vld [vmem:[%s196 + $0x8] sm:$0xff]
        %v201 = vld [vmem:[%s196 + $0x10] sm:$0xff]
        %v202 = vld [vmem:[%s196 + $0x18] sm:$0xff]
        %v203 = vld [vmem:[%s196 + $0x20] sm:$0xff]
        %v204 = vld [vmem:[%s196 + $0x28] sm:$0xff]
        %v205 = vld [vmem:[%s196 + $0x30] sm:$0xff]
        %v206 = vld [vmem:[%s196 + $0x38] sm:$0xff]
        %v207 = vld [vmem:[%s196 + $0x40] sm:$0xff]
        %v208 = vld [vmem:[%s196 + $0x48] sm:$0xff]
        %v209 = vld [vmem:[%s196 + $0x50] sm:$0xff]
        %v210 = vld [vmem:[%s196 + $0x58] sm:$0xff]
        %v211 = vld [vmem:[%s196 + $0x60] sm:$0xff]
        %v212 = vld [vmem:[%s196 + $0x68] sm:$0xff]
        %v213 = vld [vmem:[%s196 + $0x70] sm:$0xff]
        %v214 = vld [vmem:[%s196 + $0x78] sm:$0xff]
        %v215 = vmul.f32 %v199, %v199
        %v216 = vmul.f32 %v200, %v200
        %v217 = vmul.f32 %v201, %v201
        %v218 = vmul.f32 %v202, %v202
        %v219 = vmul.f32 %v203, %v203
        %v220 = vmul.f32 %v204, %v204
        %v221 = vmul.f32 %v205, %v205
        %v222 = vmul.f32 %v206, %v206
        %v223 = vmul.f32 %v207, %v207
        %v224 = vmul.f32 %v208, %v208
        %v225 = vmul.f32 %v209, %v209
        %v226 = vmul.f32 %v210, %v210
        %v227 = vmul.f32 %v211, %v211
        %v228 = vmul.f32 %v212, %v212
        %v229 = vmul.f32 %v213, %v213
        %v230 = vmul.f32 %v214, %v214
        %vm231 = vcmask 261120
        %v232 = vsel %vm231, %v215, 0.0
        %233 = vadd.xlane.f32.xlu0 %v232
        %v234 = vpop.xlane.xlu0 %233
        %v235 = vsel %vm231, %v216, 0.0
        %236 = vadd.xlane.f32.xlu0 %v235
        %v237 = vpop.xlane.xlu0 %236
        %v238 = vsel %vm231, %v217, 0.0
        %239 = vadd.xlane.f32.xlu0 %v238
        %v240 = vpop.xlane.xlu0 %239
        %v241 = vsel %vm231, %v218, 0.0
        %242 = vadd.xlane.f32.xlu0 %v241
        %v243 = vpop.xlane.xlu0 %242
        %v244 = vsel %vm231, %v219, 0.0
        %245 = vadd.xlane.f32.xlu0 %v244
        %v246 = vpop.xlane.xlu0 %245
        %v247 = vsel %vm231, %v220, 0.0
        %248 = vadd.xlane.f32.xlu0 %v247
        %v249 = vpop.xlane.xlu0 %248
        %v250 = vsel %vm231, %v221, 0.0
        %251 = vadd.xlane.f32.xlu0 %v250
        %v252 = vpop.xlane.xlu0 %251
        %v253 = vsel %vm231, %v222, 0.0
        %254 = vadd.xlane.f32.xlu0 %v253
        %v255 = vpop.xlane.xlu0 %254
        %v256 = vsel %vm231, %v223, 0.0
        %257 = vadd.xlane.f32.xlu0 %v256
        %v258 = vpop.xlane.xlu0 %257
        %v259 = vsel %vm231, %v224, 0.0
        %260 = vadd.xlane.f32.xlu0 %v259
        %v261 = vpop.xlane.xlu0 %260
        %v262 = vsel %vm231, %v225, 0.0
        %263 = vadd.xlane.f32.xlu0 %v262
        %v264 = vpop.xlane.xlu0 %263
        %v265 = vsel %vm231, %v226, 0.0
        %266 = vadd.xlane.f32.xlu0 %v265
        %v267 = vpop.xlane.xlu0 %266
        %v268 = vsel %vm231, %v227, 0.0
        %269 = vadd.xlane.f32.xlu0 %v268
        %v270 = vpop.xlane.xlu0 %269
        %v271 = vsel %vm231, %v228, 0.0
        %272 = vadd.xlane.f32.xlu0 %v271
        %v273 = vpop.xlane.xlu0 %272
        %v274 = vsel %vm231, %v229, 0.0
        %275 = vadd.xlane.f32.xlu0 %v274
        %v276 = vpop.xlane.xlu0 %275
        %v277 = vsel %vm231, %v230, 0.0
        %278 = vadd.xlane.f32.xlu0 %v277
        %v279 = vpop.xlane.xlu0 %278
        %v280 = vmax.f32 %v234, 1e-24
        %v281 = vmax.f32 %v237, 1e-24
        %v282 = vmax.f32 %v240, 1e-24
        %v283 = vmax.f32 %v243, 1e-24
        %v284 = vmax.f32 %v246, 1e-24
        %v285 = vmax.f32 %v249, 1e-24
        %v286 = vmax.f32 %v252, 1e-24
        %v287 = vmax.f32 %v255, 1e-24
        %v288 = vmax.f32 %v258, 1e-24
        %v289 = vmax.f32 %v261, 1e-24
        %v290 = vmax.f32 %v264, 1e-24
        %v291 = vmax.f32 %v267, 1e-24
        %v292 = vmax.f32 %v270, 1e-24
        %v293 = vmax.f32 %v273, 1e-24
        %v294 = vmax.f32 %v276, 1e-24
        %v295 = vmax.f32 %v279, 1e-24
        %v296 = vrsqrt.pop %v280
        %v297 = vrsqrt.pop %v281
        %v298 = vrsqrt.pop %v282
        %v299 = vrsqrt.pop %v283
        %v300 = vrsqrt.pop %v284
        %v301 = vrsqrt.pop %v285
        %v302 = vrsqrt.pop %v286
        %v303 = vrsqrt.pop %v287
        %v304 = vrsqrt.pop %v288
        %v305 = vrsqrt.pop %v289
        %v306 = vrsqrt.pop %v290
        %v307 = vrsqrt.pop %v291
        %v308 = vrsqrt.pop %v292
        %v309 = vrsqrt.pop %v293
        %v310 = vrsqrt.pop %v294
        %v311 = vrsqrt.pop %v295
        %v312 = vmul.f32 %v199, %v296
        %v313 = vmul.f32 %v200, %v297
        %v314 = vmul.f32 %v201, %v298
        %v315 = vmul.f32 %v202, %v299
        %v316 = vmul.f32 %v203, %v300
        %v317 = vmul.f32 %v204, %v301
        %v318 = vmul.f32 %v205, %v302
        %v319 = vmul.f32 %v206, %v303
        %v320 = vmul.f32 %v207, %v304
        %v321 = vmul.f32 %v208, %v305
        %v322 = vmul.f32 %v209, %v306
        %v323 = vmul.f32 %v210, %v307
        %v324 = vmul.f32 %v211, %v308
        %v325 = vmul.f32 %v212, %v309
        %v326 = vmul.f32 %v213, %v310
        %v327 = vmul.f32 %v214, %v311
        %v328 = vld [vmem:[%s1] sm:$0xff]
        %v329 = vld [vmem:[%s1 + $0x8] sm:$0xff]
        %v330 = vld [vmem:[%s1 + $0x10] sm:$0xff]
        %v331 = vld [vmem:[%s1 + $0x18] sm:$0xff]
        %v332 = vld [vmem:[%s3] sm:$0x1]
        %v334 = vlaneseq
        %v335 = vshrl.u32 %v334, 7
        %v336 = vsub.s32 0, %v335
        %v337 = vrot.slane %v332, %v336
        %v340 = vsel %vm231, %v312, 0
        %v343 = vsel %vm231, %v313, 0
        %v346 = vsel %vm231, %v314, 0
        %v349 = vsel %vm231, %v315, 0
        %v352 = vsel %vm231, %v316, 0
        %v355 = vsel %vm231, %v317, 0
        %v358 = vsel %vm231, %v318, 0
        %v361 = vsel %vm231, %v319, 0
        %v364 = vsel %vm231, %v320, 0
        %v367 = vsel %vm231, %v321, 0
        %v370 = vsel %vm231, %v322, 0
        %v373 = vsel %vm231, %v323, 0
        %v376 = vsel %vm231, %v324, 0
        %v379 = vsel %vm231, %v325, 0
        %v382 = vsel %vm231, %v326, 0
        %v385 = vsel %vm231, %v327, 0
        %387 = vmatprep.subr.mxu0 0.0
        %388 = vmatpush1.msra.mxu0 0.0
        %389 = vmatprep.subr.mxu0 0.0
        %390 = vmatpush1.msra.mxu0 0.0
        %391 = vmatprep.subr.mxu0 0.0
        %392 = vmatpush1.msra.mxu0 0.0
        %393 = vmatprep.subr.mxu0 0.0
        %394 = vmatpush1.msra.mxu0 0.0
        %395 = vmatprep.subr.mxu0 0.0
        %396 = vmatpush1.msra.mxu0 0.0
        %397 = vmatprep.subr.mxu0 0.0
        %398 = vmatpush1.msra.mxu0 0.0
        %399 = vmatprep.subr.mxu0 0.0
        %400 = vmatpush1.msra.mxu0 0.0
        %401 = vmatprep.subr.mxu0 0.0
        %402 = vmatpush1.msra.mxu0 0.0
        %403 = vmatprep.subr.mxu0 0.0
        %404 = vmatpush1.msra.mxu0 0.0
        %405 = vmatprep.subr.mxu0 0.0
        %406 = vmatpush1.msra.mxu0 0.0
        %407 = vmatprep.subr.mxu0 0.0
        %408 = vmatpush1.msra.mxu0 0.0
        %409 = vmatprep.subr.mxu0 0.0
        %410 = vmatpush1.msra.mxu0 0.0
        %411 = vmatprep.subr.mxu0 0.0
        %412 = vmatpush1.msra.mxu0 %v331
        %413 = vmatprep.subr.mxu0 0.0
        %414 = vmatpush1.msra.mxu0 %v330
        %415 = vmatprep.subr.mxu0 0.0
        %416 = vmatpush1.msra.mxu0 %v329
        %417 = vmatprep.subr.mxu0 0.0
        %418 = vmatpush1.msra.mxu0 %v328
        %419 = vmatprep.subr.mxu0 0.0
        %420 = vmatpush2.msra.mxu0 0.0
        %421 = vmatprep.subr.mxu0 0.0
        %422 = vmatpush2.msra.mxu0 0.0
        %423 = vmatprep.subr.mxu0 0.0
        %424 = vmatpush2.msra.mxu0 0.0
        %425 = vmatprep.subr.mxu0 0.0
        %426 = vmatpush2.msra.mxu0 0.0
        %427 = vmatprep.subr.mxu0 0.0
        %428 = vmatpush2.msra.mxu0 0.0
        %429 = vmatprep.subr.mxu0 0.0
        %430 = vmatpush2.msra.mxu0 0.0
        %431 = vmatprep.subr.mxu0 0.0
        %432 = vmatpush2.msra.mxu0 0.0
        %433 = vmatprep.subr.mxu0 0.0
        %434 = vmatpush2.msra.mxu0 0.0
        %435 = vmatprep.subr.mxu0 0.0
        %436 = vmatpush2.msra.mxu0 0.0
        %437 = vmatprep.subr.mxu0 0.0
        %438 = vmatpush2.msra.mxu0 0.0
        %439 = vmatprep.subr.mxu0 0.0
        %440 = vmatpush2.msra.mxu0 0.0
        %441 = vmatprep.subr.mxu0 0.0
        %442 = vmatpush2.msra.mxu0 0.0
        %443 = vmatprep.subr.mxu0 0.0
        %444 = vmatpush2.msra.mxu0 0.0
        %445 = vmatprep.subr.mxu0 0.0
        %446 = vmatpush2.msra.mxu0 0.0
        %447 = vmatprep.subr.mxu0 0.0
        %448 = vmatpush2.msra.mxu0 0.0
        %449 = vmatprep.subr.mxu0 0.0
        %450 = vmatpush2.msra.mxu0 0.0
        %451 = vmatprep.mubr.f32.mxu0 0.0
        %452 = vmatmul.mubr.f32.gmra.mxu0 %v340
        %v453 = vpop.f32.mrf.mxu0
        %v454 = vadd.f32 %v337, %v453
        %v455 = vpop.f32.mrf.mxu0
        %456 = vmatprep.mubr.f32.mxu0 0.0
        %457 = vmatmul.mubr.f32.gmra.mxu0 %v343
        %v458 = vpop.f32.mrf.mxu0
        %v459 = vadd.f32 %v337, %v458
        %v460 = vpop.f32.mrf.mxu0
        %461 = vmatprep.mubr.f32.mxu0 0.0
        %462 = vmatmul.mubr.f32.gmra.mxu0 %v346
        %v463 = vpop.f32.mrf.mxu0
        %v464 = vadd.f32 %v337, %v463
        %v465 = vpop.f32.mrf.mxu0
        %466 = vmatprep.mubr.f32.mxu0 0.0
        %467 = vmatmul.mubr.f32.gmra.mxu0 %v349
        %v468 = vpop.f32.mrf.mxu0
        %v469 = vadd.f32 %v337, %v468
        %v470 = vpop.f32.mrf.mxu0
        %471 = vmatprep.mubr.f32.mxu0 0.0
        %472 = vmatmul.mubr.f32.gmra.mxu0 %v352
        %v473 = vpop.f32.mrf.mxu0
        %v474 = vadd.f32 %v337, %v473
        %v475 = vpop.f32.mrf.mxu0
        %476 = vmatprep.mubr.f32.mxu0 0.0
        %477 = vmatmul.mubr.f32.gmra.mxu0 %v355
        %v478 = vpop.f32.mrf.mxu0
        %v479 = vadd.f32 %v337, %v478
        %v480 = vpop.f32.mrf.mxu0
        %481 = vmatprep.mubr.f32.mxu0 0.0
        %482 = vmatmul.mubr.f32.gmra.mxu0 %v358
        %v483 = vpop.f32.mrf.mxu0
        %v484 = vadd.f32 %v337, %v483
        %v485 = vpop.f32.mrf.mxu0
        %486 = vmatprep.mubr.f32.mxu0 0.0
        %487 = vmatmul.mubr.f32.gmra.mxu0 %v361
        %v488 = vpop.f32.mrf.mxu0
        %v489 = vadd.f32 %v337, %v488
        %v490 = vpop.f32.mrf.mxu0
        %491 = vmatprep.mubr.f32.mxu0 0.0
        %492 = vmatmul.mubr.f32.gmra.mxu0 %v364
        %v493 = vpop.f32.mrf.mxu0
        %v494 = vadd.f32 %v337, %v493
        %v495 = vpop.f32.mrf.mxu0
        %496 = vmatprep.mubr.f32.mxu0 0.0
        %497 = vmatmul.mubr.f32.gmra.mxu0 %v367
        %v498 = vpop.f32.mrf.mxu0
        %v499 = vadd.f32 %v337, %v498
        %v500 = vpop.f32.mrf.mxu0
        %501 = vmatprep.mubr.f32.mxu0 0.0
        %502 = vmatmul.mubr.f32.gmra.mxu0 %v370
        %v503 = vpop.f32.mrf.mxu0
        %v504 = vadd.f32 %v337, %v503
        %v505 = vpop.f32.mrf.mxu0
        %506 = vmatprep.mubr.f32.mxu0 0.0
        %507 = vmatmul.mubr.f32.gmra.mxu0 %v373
        %v508 = vpop.f32.mrf.mxu0
        %v509 = vadd.f32 %v337, %v508
        %v510 = vpop.f32.mrf.mxu0
        %511 = vmatprep.mubr.f32.mxu0 0.0
        %512 = vmatmul.mubr.f32.gmra.mxu0 %v376
        %v513 = vpop.f32.mrf.mxu0
        %v514 = vadd.f32 %v337, %v513
        %v515 = vpop.f32.mrf.mxu0
        %516 = vmatprep.mubr.f32.mxu0 0.0
        %517 = vmatmul.mubr.f32.gmra.mxu0 %v379
        %v518 = vpop.f32.mrf.mxu0
        %v519 = vadd.f32 %v337, %v518
        %v520 = vpop.f32.mrf.mxu0
        %521 = vmatprep.mubr.f32.mxu0 0.0
        %522 = vmatmul.mubr.f32.gmra.mxu0 %v382
        %v523 = vpop.f32.mrf.mxu0
        %v524 = vadd.f32 %v337, %v523
        %v525 = vpop.f32.mrf.mxu0
        %526 = vmatprep.mubr.f32.mxu0 0.0
        %527 = vmatmul.mubr.f32.gmra.mxu0 %v385
        %v528 = vpop.f32.mrf.mxu0
        %v529 = vadd.f32 %v337, %v528
        %v530 = vpop.f32.mrf.mxu0
        %531 = vdwg.mxu0
        %vm532 = vcmask 64512
        %v533 = vsel %vm532, %v454, -inf
        %534 = vmax.xlane.f32.xlu0 %v533
        %v535 = vpop.xlane.xlu0 %534
        %v536 = vsel %vm532, %v459, -inf
        %537 = vmax.xlane.f32.xlu0 %v536
        %v538 = vpop.xlane.xlu0 %537
        %v539 = vsel %vm532, %v464, -inf
        %540 = vmax.xlane.f32.xlu0 %v539
        %v541 = vpop.xlane.xlu0 %540
        %v542 = vsel %vm532, %v469, -inf
        %543 = vmax.xlane.f32.xlu0 %v542
        %v544 = vpop.xlane.xlu0 %543
        %v545 = vsel %vm532, %v474, -inf
        %546 = vmax.xlane.f32.xlu0 %v545
        %v547 = vpop.xlane.xlu0 %546
        %v548 = vsel %vm532, %v479, -inf
        %549 = vmax.xlane.f32.xlu0 %v548
        %v550 = vpop.xlane.xlu0 %549
        %v551 = vsel %vm532, %v484, -inf
        %552 = vmax.xlane.f32.xlu0 %v551
        %v553 = vpop.xlane.xlu0 %552
        %v554 = vsel %vm532, %v489, -inf
        %555 = vmax.xlane.f32.xlu0 %v554
        %v556 = vpop.xlane.xlu0 %555
        %v557 = vsel %vm532, %v494, -inf
        %558 = vmax.xlane.f32.xlu0 %v557
        %v559 = vpop.xlane.xlu0 %558
        %v560 = vsel %vm532, %v499, -inf
        %561 = vmax.xlane.f32.xlu0 %v560
        %v562 = vpop.xlane.xlu0 %561
        %v563 = vsel %vm532, %v504, -inf
        %564 = vmax.xlane.f32.xlu0 %v563
        %v565 = vpop.xlane.xlu0 %564
        %v566 = vsel %vm532, %v509, -inf
        %567 = vmax.xlane.f32.xlu0 %v566
        %v568 = vpop.xlane.xlu0 %567
        %v569 = vsel %vm532, %v514, -inf
        %570 = vmax.xlane.f32.xlu0 %v569
        %v571 = vpop.xlane.xlu0 %570
        %v572 = vsel %vm532, %v519, -inf
        %573 = vmax.xlane.f32.xlu0 %v572
        %v574 = vpop.xlane.xlu0 %573
        %v575 = vsel %vm532, %v524, -inf
        %576 = vmax.xlane.f32.xlu0 %v575
        %v577 = vpop.xlane.xlu0 %576
        %v578 = vsel %vm532, %v529, -inf
        %579 = vmax.xlane.f32.xlu0 %v578
        %v580 = vpop.xlane.xlu0 %579
        %v581 = vsub.f32 %v454, %v535
        %v582 = vsub.f32 %v459, %v538
        %v583 = vsub.f32 %v464, %v541
        %v584 = vsub.f32 %v469, %v544
        %v585 = vsub.f32 %v474, %v547
        %v586 = vsub.f32 %v479, %v550
        %v587 = vsub.f32 %v484, %v553
        %v588 = vsub.f32 %v489, %v556
        %v589 = vsub.f32 %v494, %v559
        %v590 = vsub.f32 %v499, %v562
        %v591 = vsub.f32 %v504, %v565
        %v592 = vsub.f32 %v509, %v568
        %v593 = vsub.f32 %v514, %v571
        %v594 = vsub.f32 %v519, %v574
        %v595 = vsub.f32 %v524, %v577
        %v596 = vsub.f32 %v529, %v580
        %v597 = vmul.f32 %v581, 1.442695
        %v598 = vpow.pop %v597
        %v599 = vmul.f32 %v582, 1.442695
        %v600 = vpow.pop %v599
        %v601 = vmul.f32 %v583, 1.442695
        %v602 = vpow.pop %v601
        %v603 = vmul.f32 %v584, 1.442695
        %v604 = vpow.pop %v603
        %v605 = vmul.f32 %v585, 1.442695
        %v606 = vpow.pop %v605
        %v607 = vmul.f32 %v586, 1.442695
        %v608 = vpow.pop %v607
        %v609 = vmul.f32 %v587, 1.442695
        %v610 = vpow.pop %v609
        %v611 = vmul.f32 %v588, 1.442695
        %v612 = vpow.pop %v611
        %v613 = vmul.f32 %v589, 1.442695
        %v614 = vpow.pop %v613
        %v615 = vmul.f32 %v590, 1.442695
        %v616 = vpow.pop %v615
        %v617 = vmul.f32 %v591, 1.442695
        %v618 = vpow.pop %v617
        %v619 = vmul.f32 %v592, 1.442695
        %v620 = vpow.pop %v619
        %v621 = vmul.f32 %v593, 1.442695
        %v622 = vpow.pop %v621
        %v623 = vmul.f32 %v594, 1.442695
        %v624 = vpow.pop %v623
        %v625 = vmul.f32 %v595, 1.442695
        %v626 = vpow.pop %v625
        %v627 = vmul.f32 %v596, 1.442695
        %v628 = vpow.pop %v627
        %v629 = vsel %vm532, %v598, 0.0
        %630 = vadd.xlane.f32.xlu0 %v629
        %v631 = vpop.xlane.xlu0 %630
        %v632 = vsel %vm532, %v600, 0.0
        %633 = vadd.xlane.f32.xlu0 %v632
        %v634 = vpop.xlane.xlu0 %633
        %v635 = vsel %vm532, %v602, 0.0
        %636 = vadd.xlane.f32.xlu0 %v635
        %v637 = vpop.xlane.xlu0 %636
        %v638 = vsel %vm532, %v604, 0.0
        %639 = vadd.xlane.f32.xlu0 %v638
        %v640 = vpop.xlane.xlu0 %639
        %v641 = vsel %vm532, %v606, 0.0
        %642 = vadd.xlane.f32.xlu0 %v641
        %v643 = vpop.xlane.xlu0 %642
        %v644 = vsel %vm532, %v608, 0.0
        %645 = vadd.xlane.f32.xlu0 %v644
        %v646 = vpop.xlane.xlu0 %645
        %v647 = vsel %vm532, %v610, 0.0
        %648 = vadd.xlane.f32.xlu0 %v647
        %v649 = vpop.xlane.xlu0 %648
        %v650 = vsel %vm532, %v612, 0.0
        %651 = vadd.xlane.f32.xlu0 %v650
        %v652 = vpop.xlane.xlu0 %651
        %v653 = vsel %vm532, %v614, 0.0
        %654 = vadd.xlane.f32.xlu0 %v653
        %v655 = vpop.xlane.xlu0 %654
        %v656 = vsel %vm532, %v616, 0.0
        %657 = vadd.xlane.f32.xlu0 %v656
        %v658 = vpop.xlane.xlu0 %657
        %v659 = vsel %vm532, %v618, 0.0
        %660 = vadd.xlane.f32.xlu0 %v659
        %v661 = vpop.xlane.xlu0 %660
        %v662 = vsel %vm532, %v620, 0.0
        %663 = vadd.xlane.f32.xlu0 %v662
        %v664 = vpop.xlane.xlu0 %663
        %v665 = vsel %vm532, %v622, 0.0
        %666 = vadd.xlane.f32.xlu0 %v665
        %v667 = vpop.xlane.xlu0 %666
        %v668 = vsel %vm532, %v624, 0.0
        %669 = vadd.xlane.f32.xlu0 %v668
        %v670 = vpop.xlane.xlu0 %669
        %v671 = vsel %vm532, %v626, 0.0
        %672 = vadd.xlane.f32.xlu0 %v671
        %v673 = vpop.xlane.xlu0 %672
        %v674 = vsel %vm532, %v628, 0.0
        %675 = vadd.xlane.f32.xlu0 %v674
        %v676 = vpop.xlane.xlu0 %675
        %v677 = vrcp.pop %v631
        %v678 = vmul.f32 %v598, %v677
        %v679 = vrcp.pop %v634
        %v680 = vmul.f32 %v600, %v679
        %v681 = vrcp.pop %v637
        %v682 = vmul.f32 %v602, %v681
        %v683 = vrcp.pop %v640
        %v684 = vmul.f32 %v604, %v683
        %v685 = vrcp.pop %v643
        %v686 = vmul.f32 %v606, %v685
        %v687 = vrcp.pop %v646
        %v688 = vmul.f32 %v608, %v687
        %v689 = vrcp.pop %v649
        %v690 = vmul.f32 %v610, %v689
        %v691 = vrcp.pop %v652
        %v692 = vmul.f32 %v612, %v691
        %v693 = vrcp.pop %v655
        %v694 = vmul.f32 %v614, %v693
        %v695 = vrcp.pop %v658
        %v696 = vmul.f32 %v616, %v695
        %v697 = vrcp.pop %v661
        %v698 = vmul.f32 %v618, %v697
        %v699 = vrcp.pop %v664
        %v700 = vmul.f32 %v620, %v699
        %v701 = vrcp.pop %v667
        %v702 = vmul.f32 %v622, %v701
        %v703 = vrcp.pop %v670
        %v704 = vmul.f32 %v624, %v703
        %v705 = vrcp.pop %v673
        %v706 = vmul.f32 %v626, %v705
        %v707 = vrcp.pop %v676
        %v708 = vmul.f32 %v628, %v707
        %v709 = vld [vmem:[%s2] sm:$0xff]
        %710 = vxpose.xlu0.b32.start [1/16] %v678, 128
        %711 = vxpose.xlu0.b32.cont [2/16] %v680, 128
        %712 = vxpose.xlu0.b32.cont [3/16] %v682, 128
        %713 = vxpose.xlu0.b32.cont [4/16] %v684, 128
        %714 = vxpose.xlu0.b32.cont [5/16] %v686, 128
        %715 = vxpose.xlu0.b32.cont [6/16] %v688, 128
        %716 = vxpose.xlu0.b32.cont [7/16] %v690, 128
        %717 = vxpose.xlu0.b32.cont [8/16] %v692, 128
        %718 = vxpose.xlu0.b32.cont [9/16] 0.0, 128
        %719 = vxpose.xlu0.b32.cont [10/16] 0.0, 128
        %720 = vxpose.xlu0.b32.cont [11/16] 0.0, 128
        %721 = vxpose.xlu0.b32.cont [12/16] 0.0, 128
        %722 = vxpose.xlu0.b32.cont [13/16] 0.0, 128
        %723 = vxpose.xlu0.b32.cont [14/16] 0.0, 128
        %724 = vxpose.xlu0.b32.cont [15/16] 0.0, 128
        %725 = vxpose.xlu0.b32.end [16/16] 0.0, 128
        %v726 = vpop.trf.xlu0
        %v727 = vpop.trf.xlu0
        %v728 = vpop.trf.xlu0
        %v729 = vpop.trf.xlu0
        %v730 = vpop.trf.xlu0
        %v731 = vpop.trf.xlu0
        %v732 = vpop.trf.xlu0
        %v733 = vpop.trf.xlu0
        %v734 = vpop.trf.xlu0
        %v735 = vpop.trf.xlu0
        %v736 = vpop.trf.xlu0
        %v737 = vpop.trf.xlu0
        %v738 = vpop.trf.xlu0
        %v739 = vpop.trf.xlu0
        %v740 = vpop.trf.xlu0
        %v741 = vpop.trf.xlu0
        %vm742 = vcmask 523264
        %v744 = vsel %vm742, %v726, 0
        %746 = vmatprep.subr.mxu0 0.0
        %747 = vmatpush1.msra.mxu0 0.0
        %748 = vmatprep.subr.mxu0 0.0
        %749 = vmatpush1.msra.mxu0 0.0
        %750 = vmatprep.subr.mxu0 0.0
        %751 = vmatpush1.msra.mxu0 0.0
        %752 = vmatprep.subr.mxu0 0.0
        %753 = vmatpush1.msra.mxu0 0.0
        %754 = vmatprep.subr.mxu0 0.0
        %755 = vmatpush1.msra.mxu0 0.0
        %756 = vmatprep.subr.mxu0 0.0
        %757 = vmatpush1.msra.mxu0 0.0
        %758 = vmatprep.subr.mxu0 0.0
        %759 = vmatpush1.msra.mxu0 0.0
        %760 = vmatprep.subr.mxu0 0.0
        %761 = vmatpush1.msra.mxu0 0.0
        %762 = vmatprep.subr.mxu0 0.0
        %763 = vmatpush1.msra.mxu0 %v319
        %764 = vmatprep.subr.mxu0 0.0
        %765 = vmatpush1.msra.mxu0 %v318
        %766 = vmatprep.subr.mxu0 0.0
        %767 = vmatpush1.msra.mxu0 %v317
        %768 = vmatprep.subr.mxu0 0.0
        %769 = vmatpush1.msra.mxu0 %v316
        %770 = vmatprep.subr.mxu0 0.0
        %771 = vmatpush1.msra.mxu0 %v315
        %772 = vmatprep.subr.mxu0 0.0
        %773 = vmatpush1.msra.mxu0 %v314
        %774 = vmatprep.subr.mxu0 0.0
        %775 = vmatpush1.msra.mxu0 %v313
        %776 = vmatprep.subr.mxu0 0.0
        %777 = vmatpush1.msra.mxu0 %v312
        %778 = vmatprep.subr.mxu0 0.0
        %779 = vmatpush2.msra.mxu0 0.0
        %780 = vmatprep.subr.mxu0 0.0
        %781 = vmatpush2.msra.mxu0 0.0
        %782 = vmatprep.subr.mxu0 0.0
        %783 = vmatpush2.msra.mxu0 0.0
        %784 = vmatprep.subr.mxu0 0.0
        %785 = vmatpush2.msra.mxu0 0.0
        %786 = vmatprep.subr.mxu0 0.0
        %787 = vmatpush2.msra.mxu0 0.0
        %788 = vmatprep.subr.mxu0 0.0
        %789 = vmatpush2.msra.mxu0 0.0
        %790 = vmatprep.subr.mxu0 0.0
        %791 = vmatpush2.msra.mxu0 0.0
        %792 = vmatprep.subr.mxu0 0.0
        %793 = vmatpush2.msra.mxu0 0.0
        %794 = vmatprep.subr.mxu0 0.0
        %795 = vmatpush2.msra.mxu0 0.0
        %796 = vmatprep.subr.mxu0 0.0
        %797 = vmatpush2.msra.mxu0 0.0
        %798 = vmatprep.subr.mxu0 0.0
        %799 = vmatpush2.msra.mxu0 0.0
        %800 = vmatprep.subr.mxu0 0.0
        %801 = vmatpush2.msra.mxu0 0.0
        %802 = vmatprep.subr.mxu0 0.0
        %803 = vmatpush2.msra.mxu0 0.0
        %804 = vmatprep.subr.mxu0 0.0
        %805 = vmatpush2.msra.mxu0 0.0
        %806 = vmatprep.subr.mxu0 0.0
        %807 = vmatpush2.msra.mxu0 0.0
        %808 = vmatprep.subr.mxu0 0.0
        %809 = vmatpush2.msra.mxu0 0.0
        %810 = vmatprep.mubr.f32.mxu0 0.0
        %811 = vmatmul.mubr.f32.gmra.mxu0 %v744
        %v812 = vpop.f32.mrf.mxu0
        %v813 = vadd.f32 0.0, %v812
        %v814 = vpop.f32.mrf.mxu0
        %815 = vdwg.mxu0
        %v816 = vsel %vm532, %v678, 0.0
        %v817 = vsel %vm532, %v680, 0.0
        %v818 = vadd.f32 %v816, %v817
        %v819 = vsel %vm532, %v682, 0.0
        %v820 = vadd.f32 %v818, %v819
        %v821 = vsel %vm532, %v684, 0.0
        %v822 = vadd.f32 %v820, %v821
        %v823 = vsel %vm532, %v686, 0.0
        %v824 = vadd.f32 %v822, %v823
        %v825 = vsel %vm532, %v688, 0.0
        %v826 = vadd.f32 %v824, %v825
        %v827 = vsel %vm532, %v690, 0.0
        %v828 = vadd.f32 %v826, %v827
        %v829 = vsel %vm532, %v692, 0.0
        %v830 = vadd.f32 %v828, %v829
        %v831 = vrot.slane %v830, 4
        %v832 = vadd.f32 %v830, %v831
        %v833 = vrot.slane %v832, 2
        %v834 = vadd.f32 %v832, %v833
        %v835 = vrot.slane %v834, 1
        %v836 = vadd.f32 %v834, %v835
        %837 = vxpose.xlu0.b32.start [1/16] %v836, 128
        %838 = vxpose.xlu0.b32.cont [2/16] 0.0, 128
        %839 = vxpose.xlu0.b32.cont [3/16] 0.0, 128
        %840 = vxpose.xlu0.b32.cont [4/16] 0.0, 128
        %841 = vxpose.xlu0.b32.cont [5/16] 0.0, 128
        %842 = vxpose.xlu0.b32.cont [6/16] 0.0, 128
        %843 = vxpose.xlu0.b32.cont [7/16] 0.0, 128
        %844 = vxpose.xlu0.b32.cont [8/16] 0.0, 128
        %845 = vxpose.xlu0.b32.cont [9/16] 0.0, 128
        %846 = vxpose.xlu0.b32.cont [10/16] 0.0, 128
        %847 = vxpose.xlu0.b32.cont [11/16] 0.0, 128
        %848 = vxpose.xlu0.b32.cont [12/16] 0.0, 128
        %849 = vxpose.xlu0.b32.cont [13/16] 0.0, 128
        %850 = vxpose.xlu0.b32.cont [14/16] 0.0, 128
        %851 = vxpose.xlu0.b32.cont [15/16] 0.0, 128
        %852 = vxpose.xlu0.b32.end [16/16] 0.0, 128
        %v853 = vpop.trf.xlu0
        %v854 = vpop.trf.xlu0
        %v855 = vpop.trf.xlu0
        %v856 = vpop.trf.xlu0
        %v857 = vpop.trf.xlu0
        %v858 = vpop.trf.xlu0
        %v859 = vpop.trf.xlu0
        %v860 = vpop.trf.xlu0
        %v861 = vpop.trf.xlu0
        %v862 = vpop.trf.xlu0
        %v863 = vpop.trf.xlu0
        %v864 = vpop.trf.xlu0
        %v865 = vpop.trf.xlu0
        %v866 = vpop.trf.xlu0
        %v867 = vpop.trf.xlu0
        %v868 = vpop.trf.xlu0
        %870 = vset.pattern.permute.xlu0 0
        %871 = vperm.xlu0 %870, %v853
        %v872 = vpop.permute.xlu0 %871
        %v874 = vmul.f32 %v709, %v872
        %v875 = vsub.f32 %v813, %v874
        %v876 = vmul.f32 %v875, %v875
        %v877 = vsel %vm231, %v876, 0.0
        %878 = vadd.xlane.f32.xlu0 %v877
        %v879 = vpop.xlane.xlu0 %878
        %v880 = vmax.f32 %v879, 1e-24
        %v881 = vrsqrt.pop %v880
        %v882 = vmul.f32 %v875, %v881
        %883 = vst.msk [vmem:[%s191] sm:$0xff] %vm231, %v882
        %884 = vxpose.xlu0.b32.start [1/16] %v694, 128
        %885 = vxpose.xlu0.b32.cont [2/16] %v696, 128
        %886 = vxpose.xlu0.b32.cont [3/16] %v698, 128
        %887 = vxpose.xlu0.b32.cont [4/16] %v700, 128
        %888 = vxpose.xlu0.b32.cont [5/16] %v702, 128
        %889 = vxpose.xlu0.b32.cont [6/16] %v704, 128
        %890 = vxpose.xlu0.b32.cont [7/16] %v706, 128
        %891 = vxpose.xlu0.b32.cont [8/16] %v708, 128
        %892 = vxpose.xlu0.b32.cont [9/16] 0.0, 128
        %893 = vxpose.xlu0.b32.cont [10/16] 0.0, 128
        %894 = vxpose.xlu0.b32.cont [11/16] 0.0, 128
        %895 = vxpose.xlu0.b32.cont [12/16] 0.0, 128
        %896 = vxpose.xlu0.b32.cont [13/16] 0.0, 128
        %897 = vxpose.xlu0.b32.cont [14/16] 0.0, 128
        %898 = vxpose.xlu0.b32.cont [15/16] 0.0, 128
        %899 = vxpose.xlu0.b32.end [16/16] 0.0, 128
        %v900 = vpop.trf.xlu0
        %v901 = vpop.trf.xlu0
        %v902 = vpop.trf.xlu0
        %v903 = vpop.trf.xlu0
        %v904 = vpop.trf.xlu0
        %v905 = vpop.trf.xlu0
        %v906 = vpop.trf.xlu0
        %v907 = vpop.trf.xlu0
        %v908 = vpop.trf.xlu0
        %v909 = vpop.trf.xlu0
        %v910 = vpop.trf.xlu0
        %v911 = vpop.trf.xlu0
        %v912 = vpop.trf.xlu0
        %v913 = vpop.trf.xlu0
        %v914 = vpop.trf.xlu0
        %v915 = vpop.trf.xlu0
        %v917 = vsel %vm742, %v900, 0
        %919 = vmatprep.subr.mxu0 0.0
        %920 = vmatpush1.msra.mxu0 0.0
        %921 = vmatprep.subr.mxu0 0.0
        %922 = vmatpush1.msra.mxu0 0.0
        %923 = vmatprep.subr.mxu0 0.0
        %924 = vmatpush1.msra.mxu0 0.0
        %925 = vmatprep.subr.mxu0 0.0
        %926 = vmatpush1.msra.mxu0 0.0
        %927 = vmatprep.subr.mxu0 0.0
        %928 = vmatpush1.msra.mxu0 0.0
        %929 = vmatprep.subr.mxu0 0.0
        %930 = vmatpush1.msra.mxu0 0.0
        %931 = vmatprep.subr.mxu0 0.0
        %932 = vmatpush1.msra.mxu0 0.0
        %933 = vmatprep.subr.mxu0 0.0
        %934 = vmatpush1.msra.mxu0 0.0
        %935 = vmatprep.subr.mxu0 0.0
        %936 = vmatpush1.msra.mxu0 %v327
        %937 = vmatprep.subr.mxu0 0.0
        %938 = vmatpush1.msra.mxu0 %v326
        %939 = vmatprep.subr.mxu0 0.0
        %940 = vmatpush1.msra.mxu0 %v325
        %941 = vmatprep.subr.mxu0 0.0
        %942 = vmatpush1.msra.mxu0 %v324
        %943 = vmatprep.subr.mxu0 0.0
        %944 = vmatpush1.msra.mxu0 %v323
        %945 = vmatprep.subr.mxu0 0.0
        %946 = vmatpush1.msra.mxu0 %v322
        %947 = vmatprep.subr.mxu0 0.0
        %948 = vmatpush1.msra.mxu0 %v321
        %949 = vmatprep.subr.mxu0 0.0
        %950 = vmatpush1.msra.mxu0 %v320
        %951 = vmatprep.subr.mxu0 0.0
        %952 = vmatpush2.msra.mxu0 0.0
        %953 = vmatprep.subr.mxu0 0.0
        %954 = vmatpush2.msra.mxu0 0.0
        %955 = vmatprep.subr.mxu0 0.0
        %956 = vmatpush2.msra.mxu0 0.0
        %957 = vmatprep.subr.mxu0 0.0
        %958 = vmatpush2.msra.mxu0 0.0
        %959 = vmatprep.subr.mxu0 0.0
        %960 = vmatpush2.msra.mxu0 0.0
        %961 = vmatprep.subr.mxu0 0.0
        %962 = vmatpush2.msra.mxu0 0.0
        %963 = vmatprep.subr.mxu0 0.0
        %964 = vmatpush2.msra.mxu0 0.0
        %965 = vmatprep.subr.mxu0 0.0
        %966 = vmatpush2.msra.mxu0 0.0
        %967 = vmatprep.subr.mxu0 0.0
        %968 = vmatpush2.msra.mxu0 0.0
        %969 = vmatprep.subr.mxu0 0.0
        %970 = vmatpush2.msra.mxu0 0.0
        %971 = vmatprep.subr.mxu0 0.0
        %972 = vmatpush2.msra.mxu0 0.0
        %973 = vmatprep.subr.mxu0 0.0
        %974 = vmatpush2.msra.mxu0 0.0
        %975 = vmatprep.subr.mxu0 0.0
        %976 = vmatpush2.msra.mxu0 0.0
        %977 = vmatprep.subr.mxu0 0.0
        %978 = vmatpush2.msra.mxu0 0.0
        %979 = vmatprep.subr.mxu0 0.0
        %980 = vmatpush2.msra.mxu0 0.0
        %981 = vmatprep.subr.mxu0 0.0
        %982 = vmatpush2.msra.mxu0 0.0
        %983 = vmatprep.mubr.f32.mxu0 0.0
        %984 = vmatmul.mubr.f32.gmra.mxu0 %v917
        %v985 = vpop.f32.mrf.mxu0
        %v986 = vadd.f32 0.0, %v985
        %v987 = vpop.f32.mrf.mxu0
        %988 = vdwg.mxu0
        %v989 = vsel %vm532, %v694, 0.0
        %v990 = vsel %vm532, %v696, 0.0
        %v991 = vadd.f32 %v989, %v990
        %v992 = vsel %vm532, %v698, 0.0
        %v993 = vadd.f32 %v991, %v992
        %v994 = vsel %vm532, %v700, 0.0
        %v995 = vadd.f32 %v993, %v994
        %v996 = vsel %vm532, %v702, 0.0
        %v997 = vadd.f32 %v995, %v996
        %v998 = vsel %vm532, %v704, 0.0
        %v999 = vadd.f32 %v997, %v998
        %v1000 = vsel %vm532, %v706, 0.0
        %v1001 = vadd.f32 %v999, %v1000
        %v1002 = vsel %vm532, %v708, 0.0
        %v1003 = vadd.f32 %v1001, %v1002
        %v1004 = vrot.slane %v1003, 4
        %v1005 = vadd.f32 %v1003, %v1004
        %v1006 = vrot.slane %v1005, 2
        %v1007 = vadd.f32 %v1005, %v1006
        %v1008 = vrot.slane %v1007, 1
        %v1009 = vadd.f32 %v1007, %v1008
        %1010 = vxpose.xlu0.b32.start [1/16] %v1009, 128
        %1011 = vxpose.xlu0.b32.cont [2/16] 0.0, 128
        %1012 = vxpose.xlu0.b32.cont [3/16] 0.0, 128
        %1013 = vxpose.xlu0.b32.cont [4/16] 0.0, 128
        %1014 = vxpose.xlu0.b32.cont [5/16] 0.0, 128
        %1015 = vxpose.xlu0.b32.cont [6/16] 0.0, 128
        %1016 = vxpose.xlu0.b32.cont [7/16] 0.0, 128
        %1017 = vxpose.xlu0.b32.cont [8/16] 0.0, 128
        %1018 = vxpose.xlu0.b32.cont [9/16] 0.0, 128
        %1019 = vxpose.xlu0.b32.cont [10/16] 0.0, 128
        %1020 = vxpose.xlu0.b32.cont [11/16] 0.0, 128
        %1021 = vxpose.xlu0.b32.cont [12/16] 0.0, 128
        %1022 = vxpose.xlu0.b32.cont [13/16] 0.0, 128
        %1023 = vxpose.xlu0.b32.cont [14/16] 0.0, 128
        %1024 = vxpose.xlu0.b32.cont [15/16] 0.0, 128
        %1025 = vxpose.xlu0.b32.end [16/16] 0.0, 128
        %v1026 = vpop.trf.xlu0
        %v1027 = vpop.trf.xlu0
        %v1028 = vpop.trf.xlu0
        %v1029 = vpop.trf.xlu0
        %v1030 = vpop.trf.xlu0
        %v1031 = vpop.trf.xlu0
        %v1032 = vpop.trf.xlu0
        %v1033 = vpop.trf.xlu0
        %v1034 = vpop.trf.xlu0
        %v1035 = vpop.trf.xlu0
        %v1036 = vpop.trf.xlu0
        %v1037 = vpop.trf.xlu0
        %v1038 = vpop.trf.xlu0
        %v1039 = vpop.trf.xlu0
        %v1040 = vpop.trf.xlu0
        %v1041 = vpop.trf.xlu0
        %1043 = vset.pattern.permute.xlu0 0
        %1044 = vperm.xlu0 %1043, %v1026
        %v1045 = vpop.permute.xlu0 %1044
        %v1047 = vmul.f32 %v709, %v1045
        %v1048 = vsub.f32 %v986, %v1047
        %v1049 = vmul.f32 %v1048, %v1048
        %v1050 = vsel %vm231, %v1049, 0.0
        %1051 = vadd.xlane.f32.xlu0 %v1050
        %v1052 = vpop.xlane.xlu0 %1051
        %v1053 = vmax.f32 %v1052, 1e-24
        %v1054 = vrsqrt.pop %v1053
        %v1055 = vmul.f32 %v1048, %v1054
        %s1056 = scalar_lea.vmem %s191, 8 [#allocation2]
        %1057 = vst.msk [vmem:[%s1056] sm:$0xff] %vm231, %v1055
        %s1058 = sand.u32 %s115, 1
        %s1059 = scalar_lea.sflag [#allocation3], %s1058
        %s1060 = sand.u32 %s115, 1
        %s1061 = smul.addr %s1060, 16
        %s1062 = scalar_lea.vmem [#allocation2], %s1061
        // Predicated region
        $region37: #{tpu_custom_call.1} parent=35 // pred_check
          %p1063 = pneg %p125
        $region38: #{tpu_custom_call.1} parent=35 // pred_check_branch
          %1065 = sbr.rel (%p1063) target = $region40
        $region39: #{tpu_custom_call.1} parent=35 // pred_region
          %s1066 = smul.u32 2, %s18
          %s1068 = ssub.s32 256, 256
          %1069 = vsyncadd %s1059, %s1068
          %s1070 = smul.addr %s1066, 128
          %s1071 = scalar_lea.hbm %s4, %s1070
          %s1072 = sshll.u32 %s1062, 4
          %s1073 = int_to_ptr.vmem [resolvable:$true] %s1072
          %1078 = dma.vmem_to_hbm [thread:$0]  %s1073, 256, %s1071, %s1059, 128, 128, 8
        $region40: #{tpu_custom_call.1} parent=35 // pred_fallthru
          _
      $region36: #{tpu_custom_call.1} parent=5 // pred_fallthru
        _
      %p1079 = scmp.le.s32.totalorder 2, %s13
      // Predicated region
      $region41: #{tpu_custom_call.1} parent=5 // pred_check
        %p1080 = pneg %p1079
      $region42: #{tpu_custom_call.1} parent=5 // pred_check_branch
        %1082 = sbr.rel (%p1080) target = $region44
      $region43: #{tpu_custom_call.1} parent=5 // pred_region
        %s1083 = ssub.s32 %s13, 2
        // Predicated region
        $region45: #{tpu_custom_call.1} parent=43 // pred_check
          %p1084 = pneg %p131
        $region46: #{tpu_custom_call.1} parent=43 // pred_check_branch
          %1086 = sbr.rel (%p1084) target = $region48
        $region47: #{tpu_custom_call.1} parent=43 // pred_region
          %s1087 = sand.u32 %s116, 1
          %s1088 = scalar_lea.sflag [#allocation3], %s1087
          %s1089 = sand.u32 %s116, 1
          %s1090 = smul.addr %s1089, 16
          %s1091 = scalar_lea.vmem [#allocation2], %s1090
          %1092 = dma.done %s1088, 256
        $region48: #{tpu_custom_call.1} parent=43 // pred_fallthru
          _
      $region44: #{tpu_custom_call.1} parent=5 // pred_fallthru
        _
    $region6: #{tpu_custom_call.1} parent=1 // loop_footer
      %s17 = sadd.s32 1, %s13
    $region7: #{tpu_custom_call.1} parent=1 // loop_footer_branch
      %12 = sbr.rel target = $region3
    $region8: #{tpu_custom_call.1} parent=1 // loop_exit
      _
    %1093 = vsyncpa [#allocation3], 1
    %s1094 = scalar_lea.sflag [#allocation3], 1
    %1095 = vsyncpa %s1094, 1

</llo_original>
